<compile_context>
chip_gen: v5e
topology: v5e:2x2
jax: 0.10.0
libtpu: 0.0.40
codegen_flags: <defaults>
</compile_context>

<pallas_src>
import jax
import jax.numpy as jnp
from jax import lax
from jax.experimental import pallas as pl
from jax.experimental.pallas import tpu as pltpu

HIDDEN = 64          # logical hidden width (matches the PyTorch module)
HIDDEN_PAD = 128     # padded to one full lane width -> dense, unmasked layouts
LANES = 128
DEFAULT_TILE_B = 2048
VMEM_LIMIT_BYTES = 32 * 1024 * 1024


def _round_up(x, m):
    return (x + m - 1) // m * m


def critic_kernel(x_ref, w1_ref, w2_ref, s_ref, out_ref):
    """One batch tile of the Critic MLP.

    x_ref  : (TILE_B, in_dim)   streamed per tile (f32 or bf16)
    w1_ref : (in_dim, HP)       VMEM-resident (constant index_map)
    w2_ref : (HP, HP)           VMEM-resident
    s_ref  : (8, HP) f32 slab   row0 = b1, row1 = b2, row2 = w3^T, row3[0] = b3
    out_ref: (1, TILE_B) f32    lane-dense (batch on lanes)
    """
    w_dtype = w1_ref.dtype

    # Layer 1: inputs were pre-concatenated in the wrapper -> single K=in_dim push.
    h1 = jnp.dot(x_ref[...], w1_ref[...], preferred_element_type=jnp.float32)
    h1 = jnp.maximum(h1 + s_ref[0:1, :], 0.0)

    # Layer 2.
    h2 = jnp.dot(h1.astype(w_dtype), w2_ref[...],
                 preferred_element_type=jnp.float32)
    h2 = jnp.maximum(h2 + s_ref[1:2, :], 0.0)

    # Head: (1,H) x (TILE_B,H) contracting on H -> (1, TILE_B).
    # Transpose-free and lane-dense; no h2.T materialized through the XLU.
    out = lax.dot_general(s_ref[2:3, :], h2,
                          dimension_numbers=(((1,), (1,)), ((), ())),
                          preferred_element_type=jnp.float32)
    out_ref[...] = (out + s_ref[3:4, 0:1]).astype(out_ref.dtype)


def critic_forward(obs, act, packed_params, *, tile_b=DEFAULT_TILE_B):
    """Critic forward pass as a batch-tiled Pallas kernel. Returns (B, 1) float32."""
    w1p, w2p, smalls = packed_params
    B = obs.shape[0]
    in_dim, hp = w1p.shape
    stream_dtype = w1p.dtype                      # f32 (default) or bf16

    # Pre-concatenate obs/act once in the wrapper: one streamed operand, one DMA
    # descriptor per grid step, a single K=in_dim matmul in the kernel.
    x = jnp.concatenate([obs, act], axis=-1).astype(stream_dtype)

    # Tile selection: big tiles amortize the ~0.35 us per-grid-step overhead, but
    # keep at least 2 tiles so v7x's two TensorCores both get work.
    tile_b = _round_up(max(tile_b, LANES), LANES)
    tile_b = min(tile_b, _round_up(B, LANES))
    tile_b = min(tile_b, max(LANES, _round_up(pl.cdiv(B, 2), LANES)))
    b_pad = _round_up(B, tile_b)
    n_tiles = b_pad // tile_b

    # Only pad when B isn't a tile multiple (power-of-two batches skip this copy).
    if b_pad != B:
        x = jnp.pad(x, ((0, b_pad - B), (0, 0)))
    # TODO(synk): handle the ragged tail in-kernel to avoid the pad copy entirely.

    batch_map = lambda i: (i, 0)
    const_map = lambda i: (0, 0)                  # weights pinned in VMEM

    out = pl.pallas_call(
        critic_kernel,
        out_shape=jax.ShapeDtypeStruct((n_tiles, 1, tile_b), jnp.float32),
        grid=(n_tiles,),
        in_specs=[
            pl.BlockSpec((tile_b, in_dim), batch_map),
            pl.BlockSpec((in_dim, hp), const_map),
            pl.BlockSpec((hp, hp), const_map),
            pl.BlockSpec((8, hp), const_map),
        ],
        out_specs=pl.BlockSpec((None, 1, tile_b), lambda i: (i, 0, 0)),
        compiler_params=pltpu.CompilerParams(
            dimension_semantics=("parallel",),
            vmem_limit_bytes=VMEM_LIMIT_BYTES),
    )(x, w1p, w2p, smalls)

    # (n_tiles, 1, tile_b) is contiguous in batch order -> free reshape, then crop.
    return out.reshape(b_pad, 1)[:B]


critic_forward = jax.jit(critic_forward, static_argnames=("tile_b",))


def init_critic_params(key, obs_dim, act_dim, hidden=HIDDEN):
    """PyTorch nn.Linear default init (U(-1/sqrt(fan_in), 1/sqrt(fan_in))).
    Weights stored as (in_features, out_features)."""
    in_dim = obs_dim + act_dim
    k = jax.random.split(key, 6)

    def uinit(key, shape, fan_in):
        bound = 1.0 / jnp.sqrt(jnp.float32(fan_in))
        return jax.random.uniform(key, shape, jnp.float32, -bound, bound)

    w1 = uinit(k[0], (in_dim, hidden), in_dim)
    b1 = uinit(k[1], (1, hidden), in_dim)
    w2 = uinit(k[2], (hidden, hidden), hidden)
    b2 = uinit(k[3], (1, hidden), hidden)
    w3 = uinit(k[4], (hidden, 1), hidden)
    b3 = uinit(k[5], (1, 1), hidden)
    return (w1, b1, w2, b2, w3, b3)


def pack_params(params, *, use_bf16=False):
    """Kernel-layout packing.

    - Hidden dim zero-padded 64 -> 128 (math is exact: padded b1/w2/b2/w3 entries
      are zero, so padded h1/h2 lanes stay zero).
    - Biases, the transposed head weight, and b3 are packed into one (8, 128) f32
      slab (row0=b1, row1=b2, row2=w3^T, row3[0]=b3) -> fewer kernel operands.
    - Optionally cast the streamed weights (W1, W2) to bf16; the bias slab stays f32
      so bias adds / ReLU / head stay in f32.
    """
    w1, b1, w2, b2, w3, b3 = params
    in_dim, h = w1.shape
    hp = HIDDEN_PAD
    wdt = jnp.bfloat16 if use_bf16 else jnp.float32

    w1p = jnp.zeros((in_dim, hp), jnp.float32).at[:, :h].set(w1).astype(wdt)
    w2p = jnp.zeros((hp, hp), jnp.float32).at[:h, :h].set(w2).astype(wdt)

    smalls = jnp.zeros((8, hp), jnp.float32)
    smalls = smalls.at[0, :h].set(b1.reshape(-1))
    smalls = smalls.at[1, :h].set(b2.reshape(-1))
    smalls = smalls.at[2, :h].set(w3.reshape(-1))     # head weight, transposed
    smalls = smalls.at[3, 0].set(b3.reshape(()))
    return (w1p, w2p, smalls)


def critic_reference(obs, act, params):
    """Pure-JAX reference for correctness check."""
    w1, b1, w2, b2, w3, b3 = params
    x = jnp.concatenate([obs, act], axis=-1)
    h1 = jnp.maximum(x @ w1 + b1, 0.0)
    h2 = jnp.maximum(h1 @ w2 + b2, 0.0)
    return h2 @ w3 + b3


if __name__ == "__main__":
    obs_dim, act_dim, batch = 12, 4, 8

    key = jax.random.PRNGKey(0)
    kp, ko, ka = jax.random.split(key, 3)

    params = init_critic_params(kp, obs_dim, act_dim)
    packed = pack_params(params)

    obs = jax.random.normal(ko, (batch, obs_dim), jnp.float32)
    act = jax.random.normal(ka, (batch, act_dim), jnp.float32)

    out = jax.block_until_ready(critic_forward(obs, act, packed))
    ref = critic_reference(obs, act, params)
    assert out.shape == (batch, 1), out.shape
    assert jnp.allclose(out, ref, atol=1e-5, rtol=1e-5)

    # Non-multiple batch spanning multiple grid tiles (also exercises the >=2-tile cap).
    kb1, kb2 = jax.random.split(jax.random.PRNGKey(1))
    obs_big = jax.random.normal(kb1, (777, obs_dim), jnp.float32)
    act_big = jax.random.normal(kb2, (777, act_dim), jnp.float32)
    out_big = jax.block_until_ready(critic_forward(obs_big, act_big, packed))
    ref_big = critic_reference(obs_big, act_big, params)
    assert out_big.shape == (777, 1)
    assert jnp.allclose(out_big, ref_big, atol=1e-5, rtol=1e-5)

    # Optional bf16 streaming path (reduced precision; flag-guarded, looser check).
    packed_bf16 = pack_params(params, use_bf16=True)
    out_bf16 = jax.block_until_ready(critic_forward(obs_big, act_big, packed_bf16))
    assert out_bf16.shape == (777, 1)
    assert bool(jnp.all(jnp.isfinite(out_bf16)))
    rel_err = jnp.max(jnp.abs(out_bf16 - ref_big)) / (jnp.max(jnp.abs(ref_big)) + 1e-6)
    assert float(rel_err) < 0.1, float(rel_err)

    print("KERNEL_OK")
</pallas_src>

<mosaic_0001>
module attributes {stable_mosaic.version = 11 : i64} {
  func.func @critic_kernel(%arg0: i32, %arg1: memref<128x16xf32, #tpu.memory_space<vmem>>, %arg2: memref<16x128xf32, #tpu.memory_space<vmem>>, %arg3: memref<128x128xf32, #tpu.memory_space<vmem>>, %arg4: memref<8x128xf32, #tpu.memory_space<vmem>>, %arg5: memref<1x1x128xf32, #tpu.memory_space<vmem>>) attributes {dimension_semantics = [#tpu.dimension_semantics<parallel>], iteration_bounds = array<i64: 1>, scalar_prefetch = 0 : i64, scratch_operands = 0 : i64, tpu.core_type = #tpu.core_type<tc>, window_params = [{transform_indices = @transform_0, window_bounds = array<i64: 128, 16>}, {pipeline_mode = #tpu.pipeline_mode<synchronous>, transform_indices = @transform_1, window_bounds = array<i64: 16, 128>}, {pipeline_mode = #tpu.pipeline_mode<synchronous>, transform_indices = @transform_2, window_bounds = array<i64: 128, 128>}, {pipeline_mode = #tpu.pipeline_mode<synchronous>, transform_indices = @transform_3, window_bounds = array<i64: 8, 128>}, {transform_indices = @transform_4, window_bounds = array<i64: 1, 1, 128>}]} {
    %c0 = arith.constant 0 : index
    %c0_0 = arith.constant 0 : index
    %0 = vector.load %arg1[%c0, %c0_0] : memref<128x16xf32, #tpu.memory_space<vmem>>, vector<128x16xf32>
    %c0_1 = arith.constant 0 : index
    %c0_2 = arith.constant 0 : index
    %1 = vector.load %arg2[%c0_1, %c0_2] : memref<16x128xf32, #tpu.memory_space<vmem>>, vector<16x128xf32>
    %cst = arith.constant dense<0.000000e+00> : vector<128x128xf32>
    %2 = tpu.matmul %0, %1, %cst {dimension_numbers = #tpu.dot_dimension_numbers<[1], [0], [0], [1], [0, 0, 1, 1], [], []>} : vector<128x16xf32>, vector<16x128xf32>, vector<128x128xf32> -> vector<128x128xf32>
    %c0_3 = arith.constant 0 : index
    %c0_4 = arith.constant 0 : index
    %3 = vector.load %arg4[%c0_3, %c0_4] : memref<8x128xf32, #tpu.memory_space<vmem>>, vector<1x128xf32>
    %4 = vector.broadcast %3 : vector<1x128xf32> to vector<128x128xf32>
    %5 = arith.addf %2, %4 : vector<128x128xf32>
    %cst_5 = arith.constant 0.000000e+00 : f32
    %6 = vector.broadcast %cst_5 : f32 to vector<128x128xf32>
    %7 = arith.maximumf %5, %6 : vector<128x128xf32>
    %c0_6 = arith.constant 0 : index
    %c0_7 = arith.constant 0 : index
    %8 = vector.load %arg3[%c0_6, %c0_7] : memref<128x128xf32, #tpu.memory_space<vmem>>, vector<128x128xf32>
    %cst_8 = arith.constant dense<0.000000e+00> : vector<128x128xf32>
    %9 = tpu.matmul %7, %8, %cst_8 {dimension_numbers = #tpu.dot_dimension_numbers<[1], [0], [0], [1], [0, 0, 1, 1], [], []>} : vector<128x128xf32>, vector<128x128xf32>, vector<128x128xf32> -> vector<128x128xf32>
    %c1 = arith.constant 1 : index
    %c0_9 = arith.constant 0 : index
    %10 = vector.load %arg4[%c1, %c0_9] : memref<8x128xf32, #tpu.memory_space<vmem>>, vector<1x128xf32>
    %11 = vector.broadcast %10 : vector<1x128xf32> to vector<128x128xf32>
    %12 = arith.addf %9, %11 : vector<128x128xf32>
    %cst_10 = arith.constant 0.000000e+00 : f32
    %13 = vector.broadcast %cst_10 : f32 to vector<128x128xf32>
    %14 = arith.maximumf %12, %13 : vector<128x128xf32>
    %c2 = arith.constant 2 : index
    %c0_11 = arith.constant 0 : index
    %15 = vector.load %arg4[%c2, %c0_11] : memref<8x128xf32, #tpu.memory_space<vmem>>, vector<1x128xf32>
    %cst_12 = arith.constant dense<0.000000e+00> : vector<1x128xf32>
    %16 = tpu.matmul %15, %14, %cst_12 {dimension_numbers = #tpu.dot_dimension_numbers<[1], [1], [0], [0], [0, 0, 1, 0], [], []>} : vector<1x128xf32>, vector<128x128xf32>, vector<1x128xf32> -> vector<1x128xf32>
    %c3 = arith.constant 3 : index
    %c0_13 = arith.constant 0 : index
    %17 = vector.load %arg4[%c3, %c0_13] : memref<8x128xf32, #tpu.memory_space<vmem>>, vector<1x1xf32>
    %18 = vector.broadcast %17 : vector<1x1xf32> to vector<1x128xf32>
    %19 = arith.addf %16, %18 : vector<1x128xf32>
    %c0_14 = arith.constant 0 : index
    %c0_15 = arith.constant 0 : index
    %c0_16 = arith.constant 0 : index
    %20 = vector.load %arg5[%c0_14, %c0_15, %c0_16] : memref<1x1x128xf32, #tpu.memory_space<vmem>>, vector<1x1x128xf32>
    %21 = vector.shape_cast %20 : vector<1x1x128xf32> to vector<1x128xf32>
    %22 = vector.shape_cast %19 : vector<1x128xf32> to vector<1x1x128xf32>
    tpu.vector_store %arg5[%c0_14, %c0_15, %c0_16], %22 {strides = array<i32>} : memref<1x1x128xf32, #tpu.memory_space<vmem>>, vector<1x1x128xf32>,
    return
  }
  func.func @transform_0(%arg0: i32) -> (i32, i32) {
    %c0_i32 = arith.constant 0 : i32
    %c0_i32_0 = arith.constant 0 : i32
    return %arg0, %c0_i32 : i32, i32
  }
  func.func @transform_1(%arg0: i32) -> (i32, i32) {
    %c0_i32 = arith.constant 0 : i32
    %c0_i32_0 = arith.constant 0 : i32
    %c0_i32_1 = arith.constant 0 : i32
    return %c0_i32, %c0_i32_0 : i32, i32
  }
  func.func @transform_2(%arg0: i32) -> (i32, i32) {
    %c0_i32 = arith.constant 0 : i32
    %c0_i32_0 = arith.constant 0 : i32
    %c0_i32_1 = arith.constant 0 : i32
    return %c0_i32, %c0_i32_0 : i32, i32
  }
  func.func @transform_3(%arg0: i32) -> (i32, i32) {
    %c0_i32 = arith.constant 0 : i32
    %c0_i32_0 = arith.constant 0 : i32
    %c0_i32_1 = arith.constant 0 : i32
    return %c0_i32, %c0_i32_0 : i32, i32
  }
  func.func @transform_4(%arg0: i32) -> (i32, i32, i32) {
    %c0_i32 = arith.constant 0 : i32
    %c0_i32_0 = arith.constant 0 : i32
    %c0_i32_1 = arith.constant 0 : i32
    return %arg0, %c0_i32, %c0_i32_0 : i32, i32, i32
  }
}

</mosaic_0001>

<llo_original>
// kernel: critic_forward.1
$region0: #{critic_forward.1}
  #allocation0 [shape = 'u32[]', space=smem, size = 0x4, offset = 0x4, fixed_abs, tag = 'smem constant byte address 0x4 - core index']
  #allocation1 [shape = 'u32[72,128]{1,0:T(1,128)}', space=vmem, size = 0x9000, scoped, tag = 'internal scratch']
  %s0 = inlined_call_operand.vmem [shape: f32[128,16], index: 0, kind: input, shape index: {}]
  %s1 = inlined_call_operand.vmem [shape: f32[16,128], index: 1, kind: input, shape index: {}]
  %s2 = inlined_call_operand.vmem [shape: f32[128,128], index: 2, kind: input, shape index: {}]
  %s3 = inlined_call_operand.hbm [shape: f32[8,128], index: 3, kind: input, shape index: {}]
  %s4 = inlined_call_operand.vmem [shape: f32[1,1,128], index: 4, kind: output, shape index: {}]
  %s5 = sld [smem:[#allocation0]]
  $region30: #{critic_forward.1} parent=0
    _
  %s7 = ssub.s32 1, %s5
  %s8 = scalar_select 0, %s7, %s5
  $region1: #{critic_forward.1} parent=0
    #allocation2 [shape = 'u8[4096]{0}', space=vmem, size = 0x1000, scoped, tag = 'input window, operand 3, single buffered']
    #allocation3 [shape = 's32[1]{0}', space=sflag, size = 0x4, scoped, tag = 'scoped memory for critic_forward.1']
    %9 = vsyncpa [#allocation3], 0
    // Predicated region
    $region2: #{critic_forward.1} parent=1 // pred_check
      _
    $region3: #{critic_forward.1} parent=1 // pred_check_branch
      %11 = sbr.rel (0) target = $region5
    $region4: #{critic_forward.1} parent=1 // pred_region
      _
    $region5: #{critic_forward.1} parent=1 // pred_fallthru
      _
    // Predicated region
    $region6: #{critic_forward.1} parent=1 // pred_check
      _
    $region7: #{critic_forward.1} parent=1 // pred_check_branch
      %13 = sbr.rel (0) target = $region9
    $region8: #{critic_forward.1} parent=1 // pred_region
      _
    $region9: #{critic_forward.1} parent=1 // pred_fallthru
      _
    // Predicated region
    $region10: #{critic_forward.1} parent=1 // pred_check
      _
    $region11: #{critic_forward.1} parent=1 // pred_check_branch
      %15 = sbr.rel (0) target = $region13
    $region12: #{critic_forward.1} parent=1 // pred_region
      _
    $region13: #{critic_forward.1} parent=1 // pred_fallthru
      _
    // Predicated region
    $region14: #{critic_forward.1} parent=1 // pred_check
      _
    $region15: #{critic_forward.1} parent=1 // pred_check_branch
      %17 = sbr.rel (0) target = $region17
    $region16: #{critic_forward.1} parent=1 // pred_region
      %19 = vsyncadd [#allocation3], 0
      %s21 = sshll.u32 %s3, 4
      %s22 = int_to_ptr.hbm [resolvable:$true] %s21
      %s23 = sshll.u32 [#allocation2], 4
      %s24 = int_to_ptr.vmem [resolvable:$true] %s23
      %26 = dma.hbm_to_vmem [thread:$0]  %s22, 128, %s24, [#allocation3]
    $region17: #{critic_forward.1} parent=1 // pred_fallthru
      _
    // Predicated region
    $region18: #{critic_forward.1} parent=1 // pred_check
      _
    $region19: #{critic_forward.1} parent=1 // pred_check_branch
      %28 = sbr.rel (0) target = $region21
    $region20: #{critic_forward.1} parent=1 // pred_region
      %30 = dma.done [#allocation3], 128
    $region21: #{critic_forward.1} parent=1 // pred_fallthru
      _
    %v31 = vld [vmem:[%s0] sm:$0xff]
    %v32 = vld [vmem:[%s0 + $0x8] sm:$0xff]
    %v33 = vld [vmem:[%s0 + $0x10] sm:$0xff]
    %v34 = vld [vmem:[%s0 + $0x18] sm:$0xff]
    %v35 = vld [vmem:[%s0 + $0x20] sm:$0xff]
    %v36 = vld [vmem:[%s0 + $0x28] sm:$0xff]
    %v37 = vld [vmem:[%s0 + $0x30] sm:$0xff]
    %v38 = vld [vmem:[%s0 + $0x38] sm:$0xff]
    %v39 = vld [vmem:[%s0 + $0x40] sm:$0xff]
    %v40 = vld [vmem:[%s0 + $0x48] sm:$0xff]
    %v41 = vld [vmem:[%s0 + $0x50] sm:$0xff]
    %v42 = vld [vmem:[%s0 + $0x58] sm:$0xff]
    %v43 = vld [vmem:[%s0 + $0x60] sm:$0xff]
    %v44 = vld [vmem:[%s0 + $0x68] sm:$0xff]
    %v45 = vld [vmem:[%s0 + $0x70] sm:$0xff]
    %v46 = vld [vmem:[%s0 + $0x78] sm:$0xff]
    %v47 = vld [vmem:[%s1] sm:$0xff]
    %v48 = vld [vmem:[%s1 + $0x8] sm:$0xff]
    %v49 = vld [vmem:[#allocation2] sm:$0x1]
    %v50 = vperm.slane %v49, 0
    %vm51 = vcmask 130048
    %v53 = vsel %vm51, %v31, 0
    %v56 = vsel %vm51, %v32, 0
    %v59 = vsel %vm51, %v33, 0
    %v62 = vsel %vm51, %v34, 0
    %v65 = vsel %vm51, %v35, 0
    %v68 = vsel %vm51, %v36, 0
    %v71 = vsel %vm51, %v37, 0
    %v74 = vsel %vm51, %v38, 0
    %v77 = vsel %vm51, %v39, 0
    %v80 = vsel %vm51, %v40, 0
    %v83 = vsel %vm51, %v41, 0
    %v86 = vsel %vm51, %v42, 0
    %v89 = vsel %vm51, %v43, 0
    %v92 = vsel %vm51, %v44, 0
    %v95 = vsel %vm51, %v45, 0
    %v98 = vsel %vm51, %v46, 0
    %100 = vmatpush.msra.mxu0 0.0
    %101 = vmatpush.msra.mxu0 0.0
    %102 = vmatpush.msra.mxu0 0.0
    %103 = vmatpush.msra.mxu0 0.0
    %104 = vmatpush.msra.mxu0 0.0
    %105 = vmatpush.msra.mxu0 0.0
    %106 = vmatpush.msra.mxu0 0.0
    %107 = vmatpush.msra.mxu0 0.0
    %108 = vmatpush.msra.mxu0 0.0
    %109 = vmatpush.msra.mxu0 0.0
    %110 = vmatpush.msra.mxu0 0.0
    %111 = vmatpush.msra.mxu0 0.0
    %112 = vmatpush.msra.mxu0 0.0
    %113 = vmatpush.msra.mxu0 0.0
    %114 = vmatpush.msra.mxu0 %v48
    %115 = vmatpush.msra.mxu0 %v47
    %116 = vmatmul.f32.gmra.mxu0 %v53
    %v117 = vpop.f32.mrf.mxu0
    %v118 = vadd.f32 %v50, %v117
    %119 = vmatmul.f32.gmra.mxu0 %v56
    %v120 = vpop.f32.mrf.mxu0
    %v121 = vadd.f32 %v50, %v120
    %122 = vmatmul.f32.gmra.mxu0 %v59
    %v123 = vpop.f32.mrf.mxu0
    %v124 = vadd.f32 %v50, %v123
    %125 = vmatmul.f32.gmra.mxu0 %v62
    %v126 = vpop.f32.mrf.mxu0
    %v127 = vadd.f32 %v50, %v126
    %128 = vmatmul.f32.gmra.mxu0 %v65
    %v129 = vpop.f32.mrf.mxu0
    %v130 = vadd.f32 %v50, %v129
    %131 = vmatmul.f32.gmra.mxu0 %v68
    %v132 = vpop.f32.mrf.mxu0
    %v133 = vadd.f32 %v50, %v132
    %134 = vmatmul.f32.gmra.mxu0 %v71
    %v135 = vpop.f32.mrf.mxu0
    %v136 = vadd.f32 %v50, %v135
    %137 = vmatmul.f32.gmra.mxu0 %v74
    %v138 = vpop.f32.mrf.mxu0
    %v139 = vadd.f32 %v50, %v138
    %140 = vmatmul.f32.gmra.mxu0 %v77
    %v141 = vpop.f32.mrf.mxu0
    %v142 = vadd.f32 %v50, %v141
    %143 = vmatmul.f32.gmra.mxu0 %v80
    %v144 = vpop.f32.mrf.mxu0
    %v145 = vadd.f32 %v50, %v144
    %146 = vmatmul.f32.gmra.mxu0 %v83
    %v147 = vpop.f32.mrf.mxu0
    %v148 = vadd.f32 %v50, %v147
    %149 = vmatmul.f32.gmra.mxu0 %v86
    %v150 = vpop.f32.mrf.mxu0
    %v151 = vadd.f32 %v50, %v150
    %152 = vmatmul.f32.gmra.mxu0 %v89
    %v153 = vpop.f32.mrf.mxu0
    %v154 = vadd.f32 %v50, %v153
    %155 = vmatmul.f32.gmra.mxu0 %v92
    %v156 = vpop.f32.mrf.mxu0
    %v157 = vadd.f32 %v50, %v156
    %158 = vmatmul.f32.gmra.mxu0 %v95
    %v159 = vpop.f32.mrf.mxu0
    %v160 = vadd.f32 %v50, %v159
    %161 = vmatmul.f32.gmra.mxu0 %v98
    %v162 = vpop.f32.mrf.mxu0
    %v163 = vadd.f32 %v50, %v162
    %164 = vdwg.mxu0
    %v165 = vmax.f32 %v118, 0.0
    %v166 = vmax.f32 %v121, 0.0
    %v167 = vmax.f32 %v124, 0.0
    %v168 = vmax.f32 %v127, 0.0
    %v169 = vmax.f32 %v130, 0.0
    %v170 = vmax.f32 %v133, 0.0
    %v171 = vmax.f32 %v136, 0.0
    %v172 = vmax.f32 %v139, 0.0
    %v173 = vmax.f32 %v142, 0.0
    %v174 = vmax.f32 %v145, 0.0
    %v175 = vmax.f32 %v148, 0.0
    %v176 = vmax.f32 %v151, 0.0
    %v177 = vmax.f32 %v154, 0.0
    %v178 = vmax.f32 %v157, 0.0
    %v179 = vmax.f32 %v160, 0.0
    %v180 = vmax.f32 %v163, 0.0
    %v181 = vld [vmem:[%s2] sm:$0xff]
    %v182 = vld [vmem:[%s2 + $0x8] sm:$0xff]
    %v183 = vld [vmem:[%s2 + $0x10] sm:$0xff]
    %v184 = vld [vmem:[%s2 + $0x18] sm:$0xff]
    %v185 = vld [vmem:[%s2 + $0x20] sm:$0xff]
    %v186 = vld [vmem:[%s2 + $0x28] sm:$0xff]
    %v187 = vld [vmem:[%s2 + $0x30] sm:$0xff]
    %v188 = vld [vmem:[%s2 + $0x38] sm:$0xff]
    %v189 = vld [vmem:[%s2 + $0x40] sm:$0xff]
    %v190 = vld [vmem:[%s2 + $0x48] sm:$0xff]
    %v191 = vld [vmem:[%s2 + $0x50] sm:$0xff]
    %v192 = vld [vmem:[%s2 + $0x58] sm:$0xff]
    %v193 = vld [vmem:[%s2 + $0x60] sm:$0xff]
    %v194 = vld [vmem:[%s2 + $0x68] sm:$0xff]
    %v195 = vld [vmem:[%s2 + $0x70] sm:$0xff]
    %v196 = vld [vmem:[%s2 + $0x78] sm:$0xff]
    %v197 = vld [vmem:[#allocation2 + $0x1] sm:$0x1]
    %v198 = vperm.slane %v197, 0
    %199 = vmatpush.msra.mxu0 %v196
    %200 = vmatpush.msra.mxu0 %v195
    %201 = vmatpush.msra.mxu0 %v194
    %202 = vmatpush.msra.mxu0 %v193
    %203 = vmatpush.msra.mxu0 %v192
    %204 = vmatpush.msra.mxu0 %v191
    %205 = vmatpush.msra.mxu0 %v190
    %206 = vmatpush.msra.mxu0 %v189
    %207 = vmatpush.msra.mxu0 %v188
    %208 = vmatpush.msra.mxu0 %v187
    %209 = vmatpush.msra.mxu0 %v186
    %210 = vmatpush.msra.mxu0 %v185
    %211 = vmatpush.msra.mxu0 %v184
    %212 = vmatpush.msra.mxu0 %v183
    %213 = vmatpush.msra.mxu0 %v182
    %214 = vmatpush.msra.mxu0 %v181
    %215 = vmatmul.f32.gmra.mxu0 %v165
    %v216 = vpop.f32.mrf.mxu0
    %v217 = vadd.f32 %v198, %v216
    %218 = vmatmul.f32.gmra.mxu0 %v166
    %v219 = vpop.f32.mrf.mxu0
    %v220 = vadd.f32 %v198, %v219
    %221 = vmatmul.f32.gmra.mxu0 %v167
    %v222 = vpop.f32.mrf.mxu0
    %v223 = vadd.f32 %v198, %v222
    %224 = vmatmul.f32.gmra.mxu0 %v168
    %v225 = vpop.f32.mrf.mxu0
    %v226 = vadd.f32 %v198, %v225
    %227 = vmatmul.f32.gmra.mxu0 %v169
    %v228 = vpop.f32.mrf.mxu0
    %v229 = vadd.f32 %v198, %v228
    %230 = vmatmul.f32.gmra.mxu0 %v170
    %v231 = vpop.f32.mrf.mxu0
    %v232 = vadd.f32 %v198, %v231
    %233 = vmatmul.f32.gmra.mxu0 %v171
    %v234 = vpop.f32.mrf.mxu0
    %v235 = vadd.f32 %v198, %v234
    %236 = vmatmul.f32.gmra.mxu0 %v172
    %v237 = vpop.f32.mrf.mxu0
    %v238 = vadd.f32 %v198, %v237
    %239 = vmatmul.f32.gmra.mxu0 %v173
    %v240 = vpop.f32.mrf.mxu0
    %v241 = vadd.f32 %v198, %v240
    %242 = vmatmul.f32.gmra.mxu0 %v174
    %v243 = vpop.f32.mrf.mxu0
    %v244 = vadd.f32 %v198, %v243
    %245 = vmatmul.f32.gmra.mxu0 %v175
    %v246 = vpop.f32.mrf.mxu0
    %v247 = vadd.f32 %v198, %v246
    %248 = vmatmul.f32.gmra.mxu0 %v176
    %v249 = vpop.f32.mrf.mxu0
    %v250 = vadd.f32 %v198, %v249
    %251 = vmatmul.f32.gmra.mxu0 %v177
    %v252 = vpop.f32.mrf.mxu0
    %v253 = vadd.f32 %v198, %v252
    %254 = vmatmul.f32.gmra.mxu0 %v178
    %v255 = vpop.f32.mrf.mxu0
    %v256 = vadd.f32 %v198, %v255
    %257 = vmatmul.f32.gmra.mxu0 %v179
    %v258 = vpop.f32.mrf.mxu0
    %v259 = vadd.f32 %v198, %v258
    %260 = vmatmul.f32.gmra.mxu0 %v180
    %v261 = vpop.f32.mrf.mxu0
    %v262 = vadd.f32 %v198, %v261
    %263 = vdwg.mxu0
    %v264 = vmax.f32 %v217, 0.0
    %v265 = vmax.f32 %v220, 0.0
    %v266 = vmax.f32 %v223, 0.0
    %v267 = vmax.f32 %v226, 0.0
    %v268 = vmax.f32 %v229, 0.0
    %v269 = vmax.f32 %v232, 0.0
    %v270 = vmax.f32 %v235, 0.0
    %v271 = vmax.f32 %v238, 0.0
    %v272 = vmax.f32 %v241, 0.0
    %v273 = vmax.f32 %v244, 0.0
    %v274 = vmax.f32 %v247, 0.0
    %v275 = vmax.f32 %v250, 0.0
    %v276 = vmax.f32 %v253, 0.0
    %v277 = vmax.f32 %v256, 0.0
    %v278 = vmax.f32 %v259, 0.0
    %v279 = vmax.f32 %v262, 0.0
    %v280 = vld [vmem:[#allocation2 + $0x2] sm:$0x1]
    %v281 = vld [vmem:[#allocation2 + $0x3] sm:$0x1]
    %283 = vset.pattern.permute.xlu0 0
    %284 = vperm.xlu0 %283, %v281
    %v285 = vpop.permute.xlu0 %284
    %287 = vmatpush.xpose.msra.mxu0 %v279
    %288 = vmatpush.xpose.msra.mxu0 %v278
    %289 = vmatpush.xpose.msra.mxu0 %v277
    %290 = vmatpush.xpose.msra.mxu0 %v276
    %291 = vmatpush.xpose.msra.mxu0 %v275
    %292 = vmatpush.xpose.msra.mxu0 %v274
    %293 = vmatpush.xpose.msra.mxu0 %v273
    %294 = vmatpush.xpose.msra.mxu0 %v272
    %295 = vmatpush.xpose.msra.mxu0 %v271
    %296 = vmatpush.xpose.msra.mxu0 %v270
    %297 = vmatpush.xpose.msra.mxu0 %v269
    %298 = vmatpush.xpose.msra.mxu0 %v268
    %299 = vmatpush.xpose.msra.mxu0 %v267
    %300 = vmatpush.xpose.msra.mxu0 %v266
    %301 = vmatpush.xpose.msra.mxu0 %v265
    %302 = vmatpush.xpose.msra.mxu0 %v264
    %303 = vmatmul.f32.gmra.mxu0 %v280
    %v304 = vpop.f32.mrf.mxu0
    %v305 = vadd.f32 %v285, %v304
    %306 = vdwg.mxu0
    %307 = vst [vmem:[%s4] sm:$0x1] %v305
    // Predicated region
    $region22: #{critic_forward.1} parent=1 // pred_check
      _
    $region23: #{critic_forward.1} parent=1 // pred_check_branch
      %309 = sbr.rel (0) target = $region25
    $region24: #{critic_forward.1} parent=1 // pred_region
      _
    $region25: #{critic_forward.1} parent=1 // pred_fallthru
      _
    // Predicated region
    $region26: #{critic_forward.1} parent=1 // pred_check
      _
    $region27: #{critic_forward.1} parent=1 // pred_check_branch
      %311 = sbr.rel (0) target = $region29
    $region28: #{critic_forward.1} parent=1 // pred_region
      _
    $region29: #{critic_forward.1} parent=1 // pred_fallthru
      _
    %312 = vsyncpa [#allocation3], 1

</llo_original>
